<compile_context>
chip_gen: v7x
topology: tpu7x:2x2x1
jax: 0.10.0
libtpu: 0.0.40
codegen_flags: <defaults>
</compile_context>

<pallas_src>
import functools

import jax
import jax.numpy as jnp
from jax.experimental import pallas as pl
from jax.experimental.pallas import tpu as pltpu


def _round_up(v, m):
    return ((v + m - 1) // m) * m


# ----------------------------------------------------------------------------
# Kernel: full forward pass, fused heads, lane-dense output slab
# ----------------------------------------------------------------------------
def _network_kernel(x_ref, w1_ref, b1_ref, w2_ref, b2_ref, wh_ref, bh_ref,
                    out_ref, *, n_actions):
    x = x_ref[...]

    # evaluator layer 1: Linear + ReLU
    h1 = jnp.dot(x, w1_ref[...], preferred_element_type=jnp.float32) + b1_ref[...]
    h1 = jnp.maximum(h1, 0.0)

    # evaluator layer 2: Linear + ReLU
    h2 = jnp.dot(h1, w2_ref[...], preferred_element_type=jnp.float32) + b2_ref[...]
    h2 = jnp.maximum(h2, 0.0)

    # fused head: one MXU pass producing [policy logits | value | zero pad]
    head = jnp.dot(h2, wh_ref[...], preferred_element_type=jnp.float32) + bh_ref[...]

    # softmax over the first n_actions columns only (mask value/pad columns)
    col = jax.lax.broadcasted_iota(jnp.int32, head.shape, 1)
    is_logit = col < n_actions
    masked = jnp.where(is_logit, head, jnp.float32(-1e30))
    m = jnp.max(masked, axis=-1, keepdims=True)
    e = jnp.exp(masked - m)                       # value/pad columns -> 0
    denom = jnp.sum(e, axis=-1, keepdims=True)
    policy = e * pl.reciprocal(denom, approx=True)  # EUP vrcp; VPU stays free

    # one unmasked lane-dense store: softmax in [:n_actions], value at
    # column n_actions, zeros in the padding lanes
    out_ref[...] = jnp.where(col == n_actions, head, policy)


# ----------------------------------------------------------------------------
# Wrapper
# ----------------------------------------------------------------------------
def network_forward(x, params, *, tile_b=128):
    """x: [B, input_dims] f32. Returns (policy [B, n_actions], value [B, 1])."""
    B, in_dims = x.shape
    n_actions = params["wp"].shape[1]
    hidden = params["wp"].shape[0]
    n_pad = _round_up(n_actions + 1, 128)   # lane-dense combined head width

    # Fuse (and zero-pad) the two heads: [policy | value | 0...0]
    wh = jnp.zeros((hidden, n_pad), jnp.float32)
    wh = wh.at[:, :n_actions].set(params["wp"])
    wh = wh.at[:, n_actions:n_actions + 1].set(params["wv"])
    bh = jnp.zeros((1, n_pad), jnp.float32)
    bh = bh.at[:, :n_actions].set(params["bp"])
    bh = bh.at[:, n_actions:n_actions + 1].set(params["bv"])

    weights = (params["w1"], params["b1"], params["w2"], params["b2"], wh, bh)
    kernel = functools.partial(_network_kernel, n_actions=n_actions)

    if B <= tile_b:
        # Small batch: single un-gridded invocation, everything VMEM-resident.
        out = pl.pallas_call(
            kernel,
            out_shape=jax.ShapeDtypeStruct((B, n_pad), jnp.float32),
            in_specs=[pl.BlockSpec(memory_space=pltpu.MemorySpace.VMEM)] * 7,
            out_specs=pl.BlockSpec(memory_space=pltpu.MemorySpace.VMEM),
        )(x, *weights)
    else:
        # Large batch: tile the batch axis; weights stay VMEM-resident across
        # iterations (constant index_map); batch axis is "parallel" (v7x 2 TCs).
        B_pad = _round_up(B, tile_b)
        x_p = jnp.pad(x, ((0, B_pad - B), (0, 0))) if B_pad != B else x

        def const_spec(a):
            nd = a.ndim
            return pl.BlockSpec(a.shape, lambda i, _nd=nd: (0,) * _nd)

        in_specs = [pl.BlockSpec((tile_b, in_dims), lambda i: (i, 0))]
        in_specs += [const_spec(w) for w in weights]
        out_specs = pl.BlockSpec((tile_b, n_pad), lambda i: (i, 0))

        out = pl.pallas_call(
            kernel,
            grid=(B_pad // tile_b,),
            in_specs=in_specs,
            out_specs=out_specs,
            out_shape=jax.ShapeDtypeStruct((B_pad, n_pad), jnp.float32),
            compiler_params=pltpu.CompilerParams(
                dimension_semantics=("parallel",)),
        )(x_p, *weights)
        out = out[:B]

    policy = out[:, :n_actions]
    value = out[:, n_actions:n_actions + 1]
    return policy, value


# ----------------------------------------------------------------------------
# Parameter init (PyTorch nn.Linear-style uniform bounds), weights stored
# pre-transposed to (in, out) so the kernel computes y = x @ W + b directly.
# ----------------------------------------------------------------------------
def init_params(key, input_dims, n_actions, layers=(30, 30)):
    def linear(k, fan_in, fan_out):
        kw, kb = jax.random.split(k)
        bound = 1.0 / jnp.sqrt(jnp.float32(fan_in))
        w = jax.random.uniform(kw, (fan_in, fan_out), jnp.float32, -bound, bound)
        b = jax.random.uniform(kb, (1, fan_out), jnp.float32, -bound, bound)
        return w, b

    k1, k2, k3, k4 = jax.random.split(key, 4)
    w1, b1 = linear(k1, input_dims, layers[0])
    w2, b2 = linear(k2, layers[0], layers[1])
    wp, bp = linear(k3, layers[1], n_actions)
    wv, bv = linear(k4, layers[1], 1)
    return dict(w1=w1, b1=b1, w2=w2, b2=b2, wp=wp, bp=bp, wv=wv, bv=bv)


def reference_forward(x, p):
    """Plain-JAX reference for validation."""
    h1 = jnp.maximum(x @ p["w1"] + p["b1"], 0.0)
    h2 = jnp.maximum(h1 @ p["w2"] + p["b2"], 0.0)
    logits = h2 @ p["wp"] + p["bp"]
    policy = jax.nn.softmax(logits, axis=-1)
    value = h2 @ p["wv"] + p["bv"]
    return policy, value


if __name__ == "__main__":
    # Shapes consistent with Network(input_dims=16, n_actions=8, layers=[30, 30])
    input_dims, n_actions, layers = 16, 8, (30, 30)

    key = jax.random.PRNGKey(0)
    kx, kp, kx2 = jax.random.split(key, 3)
    params = init_params(kp, input_dims, n_actions, layers)

    # --- small batch: single un-gridded invocation ---
    x = jax.random.normal(kx, (8, input_dims), jnp.float32)
    policy, value = jax.block_until_ready(network_forward(x, params))
    ref_policy, ref_value = reference_forward(x, params)
    assert policy.shape == (8, n_actions) and value.shape == (8, 1)
    assert jnp.allclose(policy, ref_policy, atol=2e-3, rtol=1e-3)
    assert jnp.allclose(value, ref_value, atol=1e-3, rtol=1e-3)
    assert jnp.allclose(jnp.sum(policy, axis=-1), 1.0, atol=2e-3)

    # --- larger batch: batch-tiled path (weights VMEM-resident, parallel axis) ---
    xb = jax.random.normal(kx2, (300, input_dims), jnp.float32)  # non-multiple of tile
    policy_b, value_b = jax.block_until_ready(
        network_forward(xb, params, tile_b=128))
    ref_policy_b, ref_value_b = reference_forward(xb, params)
    assert policy_b.shape == (300, n_actions) and value_b.shape == (300, 1)
    assert jnp.allclose(policy_b, ref_policy_b, atol=2e-3, rtol=1e-3)
    assert jnp.allclose(value_b, ref_value_b, atol=1e-3, rtol=1e-3)

    # TODO(synk): optimizer (Adam) / training step from the module is host-side
    # state and intentionally not implemented in the kernel.
    print("KERNEL_OK")
</pallas_src>

<mosaic_0001>
module attributes {stable_mosaic.version = 11 : i64} {
  func.func @_network_kernel(%arg0: memref<8x16xf32, #tpu.memory_space<vmem>>, %arg1: memref<16x30xf32, #tpu.memory_space<vmem>>, %arg2: memref<1x30xf32, #tpu.memory_space<vmem>>, %arg3: memref<30x30xf32, #tpu.memory_space<vmem>>, %arg4: memref<1x30xf32, #tpu.memory_space<vmem>>, %arg5: memref<30x128xf32, #tpu.memory_space<vmem>>, %arg6: memref<1x128xf32, #tpu.memory_space<vmem>>, %arg7: memref<8x128xf32, #tpu.memory_space<vmem>>) attributes {dimension_semantics = [], scalar_prefetch = 0 : i64, scratch_operands = 0 : i64, tpu.core_type = #tpu.core_type<tc>} {
    %c0 = arith.constant 0 : index
    %c0_0 = arith.constant 0 : index
    %0 = vector.load %arg0[%c0, %c0_0] : memref<8x16xf32, #tpu.memory_space<vmem>>, vector<8x16xf32>
    %c0_1 = arith.constant 0 : index
    %c0_2 = arith.constant 0 : index
    %1 = vector.load %arg1[%c0_1, %c0_2] : memref<16x30xf32, #tpu.memory_space<vmem>>, vector<16x30xf32>
    %cst = arith.constant dense<0.000000e+00> : vector<8x30xf32>
    %2 = tpu.matmul %0, %1, %cst {dimension_numbers = #tpu.dot_dimension_numbers<[1], [0], [0], [1], [0, 0, 1, 1], [], []>} : vector<8x16xf32>, vector<16x30xf32>, vector<8x30xf32> -> vector<8x30xf32>
    %c0_3 = arith.constant 0 : index
    %c0_4 = arith.constant 0 : index
    %3 = vector.load %arg2[%c0_3, %c0_4] : memref<1x30xf32, #tpu.memory_space<vmem>>, vector<1x30xf32>
    %4 = vector.broadcast %3 : vector<1x30xf32> to vector<8x30xf32>
    %5 = arith.addf %2, %4 : vector<8x30xf32>
    %cst_5 = arith.constant 0.000000e+00 : f32
    %6 = vector.broadcast %cst_5 : f32 to vector<8x30xf32>
    %7 = arith.maximumf %5, %6 : vector<8x30xf32>
    %c0_6 = arith.constant 0 : index
    %c0_7 = arith.constant 0 : index
    %8 = vector.load %arg3[%c0_6, %c0_7] : memref<30x30xf32, #tpu.memory_space<vmem>>, vector<30x30xf32>
    %cst_8 = arith.constant dense<0.000000e+00> : vector<8x30xf32>
    %9 = tpu.matmul %7, %8, %cst_8 {dimension_numbers = #tpu.dot_dimension_numbers<[1], [0], [0], [1], [0, 0, 1, 1], [], []>} : vector<8x30xf32>, vector<30x30xf32>, vector<8x30xf32> -> vector<8x30xf32>
    %c0_9 = arith.constant 0 : index
    %c0_10 = arith.constant 0 : index
    %10 = vector.load %arg4[%c0_9, %c0_10] : memref<1x30xf32, #tpu.memory_space<vmem>>, vector<1x30xf32>
    %11 = vector.broadcast %10 : vector<1x30xf32> to vector<8x30xf32>
    %12 = arith.addf %9, %11 : vector<8x30xf32>
    %cst_11 = arith.constant 0.000000e+00 : f32
    %13 = vector.broadcast %cst_11 : f32 to vector<8x30xf32>
    %14 = arith.maximumf %12, %13 : vector<8x30xf32>
    %c0_12 = arith.constant 0 : index
    %c0_13 = arith.constant 0 : index
    %15 = vector.load %arg5[%c0_12, %c0_13] : memref<30x128xf32, #tpu.memory_space<vmem>>, vector<30x128xf32>
    %cst_14 = arith.constant dense<0.000000e+00> : vector<8x128xf32>
    %16 = tpu.matmul %14, %15, %cst_14 {dimension_numbers = #tpu.dot_dimension_numbers<[1], [0], [0], [1], [0, 0, 1, 1], [], []>} : vector<8x30xf32>, vector<30x128xf32>, vector<8x128xf32> -> vector<8x128xf32>
    %c0_15 = arith.constant 0 : index
    %c0_16 = arith.constant 0 : index
    %17 = vector.load %arg6[%c0_15, %c0_16] : memref<1x128xf32, #tpu.memory_space<vmem>>, vector<1x128xf32>
    %18 = vector.broadcast %17 : vector<1x128xf32> to vector<8x128xf32>
    %19 = arith.addf %16, %18 : vector<8x128xf32>
    %20 = tpu.iota {dimensions = array<i32: 1>} : vector<8x128xi32>
    %c8_i32 = arith.constant 8 : i32
    %21 = vector.broadcast %c8_i32 : i32 to vector<8x128xi32>
    %22 = arith.cmpi slt, %20, %21 : vector<8x128xi32>
    %cst_17 = arith.constant -1.000000e+30 : f32
    %23 = vector.broadcast %cst_17 : f32 to vector<8x128xf32>
    %24 = arith.select %22, %19, %23 : vector<8x128xi1>, vector<8x128xf32>
    %cst_18 = arith.constant dense<0xFF800000> : vector<8xf32>
    %25 = vector.multi_reduction <maximumf>, %24, %cst_18 [1] : vector<8x128xf32> to vector<8xf32>
    %26 = vector.shape_cast %25 : vector<8xf32> to vector<8x1xf32>
    %27 = vector.broadcast %26 : vector<8x1xf32> to vector<8x128xf32>
    %28 = arith.subf %24, %27 : vector<8x128xf32>
    %29 = math.exp %28 : vector<8x128xf32>
    %cst_19 = arith.constant dense<0.000000e+00> : vector<8xf32>
    %30 = vector.multi_reduction <add>, %29, %cst_19 [1] : vector<8x128xf32> to vector<8xf32>
    %31 = vector.shape_cast %30 : vector<8xf32> to vector<8x1xf32>
    %32 = tpu.reciprocal %31 {approx = true} : vector<8x1xf32> -> vector<8x1xf32>
    %33 = vector.broadcast %32 : vector<8x1xf32> to vector<8x128xf32>
    %34 = arith.mulf %29, %33 : vector<8x128xf32>
    %c8_i32_20 = arith.constant 8 : i32
    %35 = vector.broadcast %c8_i32_20 : i32 to vector<8x128xi32>
    %36 = arith.cmpi eq, %20, %35 : vector<8x128xi32>
    %37 = arith.select %36, %19, %34 : vector<8x128xi1>, vector<8x128xf32>
    %c0_21 = arith.constant 0 : index
    %c0_22 = arith.constant 0 : index
    %38 = vector.load %arg7[%c0_21, %c0_22] : memref<8x128xf32, #tpu.memory_space<vmem>>, vector<8x128xf32>
    tpu.vector_store %arg7[%c0_21, %c0_22], %37 {strides = array<i32>} : memref<8x128xf32, #tpu.memory_space<vmem>>, vector<8x128xf32>,
    return
  }
}

</mosaic_0001>

<llo_original>
// kernel: tpu_custom_call.1
$region0: #{tpu_custom_call.1}
  #allocation0 [shape = 'u32[]', space=smem, size = 0x4, offset = 0x4, fixed_abs, tag = 'smem constant byte address 0x4 - core index']
  #allocation1 [shape = 'u32[144,128]{1,0:T(1,128)}', space=vmem, size = 0x12000, scoped, tag = 'internal scratch']
  %s0 = inlined_call_operand.hbm [shape: f32[8,16], index: 0, kind: input, shape index: {}]
  %s1 = inlined_call_operand.hbm [shape: f32[16,30], index: 1, kind: input, shape index: {}]
  %s2 = inlined_call_operand.vmem [shape: f32[1,30], index: 2, kind: input, shape index: {}]
  %s3 = inlined_call_operand.hbm [shape: f32[30,30], index: 3, kind: input, shape index: {}]
  %s4 = inlined_call_operand.vmem [shape: f32[1,30], index: 4, kind: input, shape index: {}]
  %s5 = inlined_call_operand.hbm [shape: f32[30,128], index: 5, kind: input, shape index: {}]
  %s6 = inlined_call_operand.vmem [shape: f32[1,128], index: 6, kind: input, shape index: {}]
  %s7 = inlined_call_operand.hbm [shape: f32[8,128], index: 7, kind: output, shape index: {}]
  %s8 = sld [smem:[#allocation0]]
  $region54: #{tpu_custom_call.1} parent=0
    _
  %s10 = ssub.s32 1, %s8
  %s11 = scalar_select 0, %s10, %s8
  $region1: #{tpu_custom_call.1} parent=0
    #allocation2 [shape = 'u8[4096]{0}', space=vmem, size = 0x1000, scoped, tag = 'input window, operand 0, single buffered']
    #allocation3 [shape = 's32[1]{0}', space=sflag, size = 0x4, scoped, tag = 'scoped memory for tpu_custom_call.1']
    #allocation4 [shape = 's32[1]{0}', space=sflag, size = 0x4, scoped, tag = 'scoped memory for tpu_custom_call.1']
    #allocation5 [shape = 'u8[8192]{0}', space=vmem, size = 0x2000, scoped, tag = 'input window, operand 1, single buffered']
    #allocation6 [shape = 's32[1]{0}', space=sflag, size = 0x4, scoped, tag = 'scoped memory for tpu_custom_call.1']
    #allocation7 [shape = 'u8[16384]{0}', space=vmem, size = 0x4000, scoped, tag = 'input window, operand 3, single buffered']
    #allocation8 [shape = 'u8[16384]{0}', space=vmem, size = 0x4000, scoped, tag = 'input window, operand 5, single buffered']
    #allocation9 [shape = 's32[1]{0}', space=sflag, size = 0x4, scoped, tag = 'scoped memory for tpu_custom_call.1']
    #allocation10 [shape = 'u8[4096]{0}', space=vmem, size = 0x1000, scoped, tag = 'output window, operand 0, single buffered']
    %12 = vsyncpa [#allocation3], 0
    %13 = vsyncpa [#allocation6], 0
    %14 = vsyncpa [#allocation9], 0
    %15 = vsyncpa [#allocation4], 0
    // Predicated region
    $region2: #{tpu_custom_call.1} parent=1 // pred_check
      _
    $region3: #{tpu_custom_call.1} parent=1 // pred_check_branch
      %17 = sbr.rel (0) target = $region5
    $region4: #{tpu_custom_call.1} parent=1 // pred_region
      %s19 = ssub.s32 128, 128
      %20 = vsyncadd [#allocation3], %s19
      %s22 = sshll.u32 [#allocation2], 4
      %s23 = int_to_ptr.vmem [resolvable:$true] %s22
      %25 = dma.hbm_to_vmem [thread:$0]  %s0, 128, %s23, [#allocation3]
    $region5: #{tpu_custom_call.1} parent=1 // pred_fallthru
      _
    // Predicated region
    $region6: #{tpu_custom_call.1} parent=1 // pred_check
      _
    $region7: #{tpu_custom_call.1} parent=1 // pred_check_branch
      %27 = sbr.rel (0) target = $region9
    $region8: #{tpu_custom_call.1} parent=1 // pred_region
      %s29 = ssub.s32 256, 256
      %30 = vsyncadd [#allocation6], %s29
      %s31 = sshll.u32 [#allocation5], 4
      %s32 = int_to_ptr.vmem [resolvable:$true] %s31
      %37 = dma.hbm_to_vmem [thread:$0]  %s1, 256, %s32, [#allocation6], 128, 128, 8
    $region9: #{tpu_custom_call.1} parent=1 // pred_fallthru
      _
    // Predicated region
    $region10: #{tpu_custom_call.1} parent=1 // pred_check
      _
    $region11: #{tpu_custom_call.1} parent=1 // pred_check_branch
      %39 = sbr.rel (0) target = $region13
    $region12: #{tpu_custom_call.1} parent=1 // pred_region
      _
    $region13: #{tpu_custom_call.1} parent=1 // pred_fallthru
      _
    // Predicated region
    $region14: #{tpu_custom_call.1} parent=1 // pred_check
      _
    $region15: #{tpu_custom_call.1} parent=1 // pred_check_branch
      %41 = sbr.rel (0) target = $region17
    $region16: #{tpu_custom_call.1} parent=1 // pred_region
      %s43 = ssub.s32 512, 512
      %44 = vsyncadd [#allocation6], %s43
      %s45 = sshll.u32 [#allocation7], 4
      %s46 = int_to_ptr.vmem [resolvable:$true] %s45
      %51 = dma.hbm_to_vmem [thread:$0]  %s3, 512, %s46, [#allocation6], 128, 128, 8
    $region17: #{tpu_custom_call.1} parent=1 // pred_fallthru
      _
    // Predicated region
    $region18: #{tpu_custom_call.1} parent=1 // pred_check
      _
    $region19: #{tpu_custom_call.1} parent=1 // pred_check_branch
      %53 = sbr.rel (0) target = $region21
    $region20: #{tpu_custom_call.1} parent=1 // pred_region
      _
    $region21: #{tpu_custom_call.1} parent=1 // pred_fallthru
      _
    // Predicated region
    $region22: #{tpu_custom_call.1} parent=1 // pred_check
      _
    $region23: #{tpu_custom_call.1} parent=1 // pred_check_branch
      %55 = sbr.rel (0) target = $region25
    $region24: #{tpu_custom_call.1} parent=1 // pred_region
      %s57 = ssub.s32 512, 512
      %58 = vsyncadd [#allocation9], %s57
      %s59 = sshll.u32 [#allocation8], 4
      %s60 = int_to_ptr.vmem [resolvable:$true] %s59
      %65 = dma.hbm_to_vmem [thread:$0]  %s5, 512, %s60, [#allocation9], 128, 128, 8
    $region25: #{tpu_custom_call.1} parent=1 // pred_fallthru
      _
    // Predicated region
    $region26: #{tpu_custom_call.1} parent=1 // pred_check
      _
    $region27: #{tpu_custom_call.1} parent=1 // pred_check_branch
      %67 = sbr.rel (0) target = $region29
    $region28: #{tpu_custom_call.1} parent=1 // pred_region
      _
    $region29: #{tpu_custom_call.1} parent=1 // pred_fallthru
      _
    // Predicated region
    $region30: #{tpu_custom_call.1} parent=1 // pred_check
      _
    $region31: #{tpu_custom_call.1} parent=1 // pred_check_branch
      %69 = sbr.rel (0) target = $region33
    $region32: #{tpu_custom_call.1} parent=1 // pred_region
      %70 = dma.done [#allocation3], 128
    $region33: #{tpu_custom_call.1} parent=1 // pred_fallthru
      _
    // Predicated region
    $region34: #{tpu_custom_call.1} parent=1 // pred_check
      _
    $region35: #{tpu_custom_call.1} parent=1 // pred_check_branch
      %72 = sbr.rel (0) target = $region37
    $region36: #{tpu_custom_call.1} parent=1 // pred_region
      %73 = dma.done [#allocation6], 256
    $region37: #{tpu_custom_call.1} parent=1 // pred_fallthru
      _
    // Predicated region
    $region38: #{tpu_custom_call.1} parent=1 // pred_check
      _
    $region39: #{tpu_custom_call.1} parent=1 // pred_check_branch
      %75 = sbr.rel (0) target = $region41
    $region40: #{tpu_custom_call.1} parent=1 // pred_region
      %76 = dma.done [#allocation6], 512
    $region41: #{tpu_custom_call.1} parent=1 // pred_fallthru
      _
    // Predicated region
    $region42: #{tpu_custom_call.1} parent=1 // pred_check
      _
    $region43: #{tpu_custom_call.1} parent=1 // pred_check_branch
      %78 = sbr.rel (0) target = $region45
    $region44: #{tpu_custom_call.1} parent=1 // pred_region
      %79 = dma.done [#allocation9], 512
    $region45: #{tpu_custom_call.1} parent=1 // pred_fallthru
      _
    %v80 = vld [vmem:[#allocation2] sm:$0xff]
    %v81 = vld [vmem:[#allocation5] sm:$0xff]
    %v82 = vld [vmem:[#allocation5 + $0x8] sm:$0xff]
    %v83 = vld [vmem:[%s2] sm:$0x1]
    %v85 = vlaneseq
    %v86 = vshrl.u32 %v85, 7
    %v87 = vsub.s32 0, %v86
    %v88 = vrot.slane %v83, %v87
    %vm90 = vcmask 130048
    %v92 = vsel %vm90, %v80, 0
    %94 = vmatprep.subr.mxu0 0.0
    %95 = vmatpush1.msra.mxu0 %v81
    %96 = vmatprep.subr.mxu0 0.0
    %97 = vmatpush1.msra.mxu0 %v82
    %98 = vmatprep.subr.mxu0 0.0
    %99 = vmatpush1.msra.mxu0 0.0
    %100 = vmatprep.subr.mxu0 0.0
    %101 = vmatpush1.msra.mxu0 0.0
    %102 = vmatprep.subr.mxu0 0.0
    %103 = vmatpush1.msra.mxu0 0.0
    %104 = vmatprep.subr.mxu0 0.0
    %105 = vmatpush1.msra.mxu0 0.0
    %106 = vmatprep.subr.mxu0 0.0
    %107 = vmatpush1.msra.mxu0 0.0
    %108 = vmatprep.subr.mxu0 0.0
    %109 = vmatpush1.msra.mxu0 0.0
    %110 = vmatprep.subr.mxu0 0.0
    %111 = vmatpush1.msra.mxu0 0.0
    %112 = vmatprep.subr.mxu0 0.0
    %113 = vmatpush1.msra.mxu0 0.0
    %114 = vmatprep.subr.mxu0 0.0
    %115 = vmatpush1.msra.mxu0 0.0
    %116 = vmatprep.subr.mxu0 0.0
    %117 = vmatpush1.msra.mxu0 0.0
    %118 = vmatprep.subr.mxu0 0.0
    %119 = vmatpush1.msra.mxu0 0.0
    %120 = vmatprep.subr.mxu0 0.0
    %121 = vmatpush1.msra.mxu0 0.0
    %122 = vmatprep.subr.mxu0 0.0
    %123 = vmatpush1.msra.mxu0 0.0
    %124 = vmatprep.subr.mxu0 0.0
    %125 = vmatpush1.msra.mxu0 0.0
    %126 = vmatprep.subr.mxu0 0.0
    %127 = vmatpush1.msra.mxu0 0.0
    %128 = vmatprep.subr.mxu0 0.0
    %129 = vmatpush1.msra.mxu0 0.0
    %130 = vmatprep.subr.mxu0 0.0
    %131 = vmatpush1.msra.mxu0 0.0
    %132 = vmatprep.subr.mxu0 0.0
    %133 = vmatpush1.msra.mxu0 0.0
    %134 = vmatprep.subr.mxu0 0.0
    %135 = vmatpush1.msra.mxu0 0.0
    %136 = vmatprep.subr.mxu0 0.0
    %137 = vmatpush1.msra.mxu0 0.0
    %138 = vmatprep.subr.mxu0 0.0
    %139 = vmatpush1.msra.mxu0 0.0
    %140 = vmatprep.subr.mxu0 0.0
    %141 = vmatpush1.msra.mxu0 0.0
    %142 = vmatprep.subr.mxu0 0.0
    %143 = vmatpush1.msra.mxu0 0.0
    %144 = vmatprep.subr.mxu0 0.0
    %145 = vmatpush1.msra.mxu0 0.0
    %146 = vmatprep.subr.mxu0 0.0
    %147 = vmatpush1.msra.mxu0 0.0
    %148 = vmatprep.subr.mxu0 0.0
    %149 = vmatpush1.msra.mxu0 0.0
    %150 = vmatprep.subr.mxu0 0.0
    %151 = vmatpush1.msra.mxu0 0.0
    %152 = vmatprep.subr.mxu0 0.0
    %153 = vmatpush1.msra.mxu0 0.0
    %154 = vmatprep.subr.mxu0 0.0
    %155 = vmatpush1.msra.mxu0 0.0
    %156 = vmatprep.subr.mxu0 0.0
    %157 = vmatpush1.msra.mxu0 0.0
    %158 = vmatprep.mubr.f32.mxu0 0.0
    %159 = vmatmul.mubr.f32.gmra.mrb[0].mxu0 %v92
    %v160 = vpop.f32.mrb[0].mxu0
    %v161 = vadd.f32 %v88, %v160
    %v162 = vpop.f32.mrb[0].mxu0
    %163 = vdwg.mxu0
    %v164 = vmax.f32 %v161, 0.0
    %v165 = vld [vmem:[#allocation7] sm:$0xff]
    %v166 = vld [vmem:[#allocation7 + $0x8] sm:$0xff]
    %v167 = vld [vmem:[#allocation7 + $0x10] sm:$0xff]
    %v168 = vld [vmem:[#allocation7 + $0x18] sm:$0x3f]
    %v169 = vld [vmem:[%s4] sm:$0x1]
    %v171 = vlaneseq
    %v172 = vshrl.u32 %v171, 7
    %v173 = vsub.s32 0, %v172
    %v174 = vrot.slane %v169, %v173
    %vm176 = vcmask 244736
    %v178 = vsel %vm176, %v164, 0
    %vm180 = vcmask 1045504
    %v182 = vsel %vm180, %v168, 0
    %184 = vmatprep.subr.mxu0 0.0
    %185 = vmatpush1.msra.mxu0 %v165
    %186 = vmatprep.subr.mxu0 0.0
    %187 = vmatpush1.msra.mxu0 %v166
    %188 = vmatprep.subr.mxu0 0.0
    %189 = vmatpush1.msra.mxu0 %v167
    %190 = vmatprep.subr.mxu0 0.0
    %191 = vmatpush1.msra.mxu0 %v182
    %192 = vmatprep.subr.mxu0 0.0
    %193 = vmatpush1.msra.mxu0 0.0
    %194 = vmatprep.subr.mxu0 0.0
    %195 = vmatpush1.msra.mxu0 0.0
    %196 = vmatprep.subr.mxu0 0.0
    %197 = vmatpush1.msra.mxu0 0.0
    %198 = vmatprep.subr.mxu0 0.0
    %199 = vmatpush1.msra.mxu0 0.0
    %200 = vmatprep.subr.mxu0 0.0
    %201 = vmatpush1.msra.mxu0 0.0
    %202 = vmatprep.subr.mxu0 0.0
    %203 = vmatpush1.msra.mxu0 0.0
    %204 = vmatprep.subr.mxu0 0.0
    %205 = vmatpush1.msra.mxu0 0.0
    %206 = vmatprep.subr.mxu0 0.0
    %207 = vmatpush1.msra.mxu0 0.0
    %208 = vmatprep.subr.mxu0 0.0
    %209 = vmatpush1.msra.mxu0 0.0
    %210 = vmatprep.subr.mxu0 0.0
    %211 = vmatpush1.msra.mxu0 0.0
    %212 = vmatprep.subr.mxu0 0.0
    %213 = vmatpush1.msra.mxu0 0.0
    %214 = vmatprep.subr.mxu0 0.0
    %215 = vmatpush1.msra.mxu0 0.0
    %216 = vmatprep.subr.mxu0 0.0
    %217 = vmatpush1.msra.mxu0 0.0
    %218 = vmatprep.subr.mxu0 0.0
    %219 = vmatpush1.msra.mxu0 0.0
    %220 = vmatprep.subr.mxu0 0.0
    %221 = vmatpush1.msra.mxu0 0.0
    %222 = vmatprep.subr.mxu0 0.0
    %223 = vmatpush1.msra.mxu0 0.0
    %224 = vmatprep.subr.mxu0 0.0
    %225 = vmatpush1.msra.mxu0 0.0
    %226 = vmatprep.subr.mxu0 0.0
    %227 = vmatpush1.msra.mxu0 0.0
    %228 = vmatprep.subr.mxu0 0.0
    %229 = vmatpush1.msra.mxu0 0.0
    %230 = vmatprep.subr.mxu0 0.0
    %231 = vmatpush1.msra.mxu0 0.0
    %232 = vmatprep.subr.mxu0 0.0
    %233 = vmatpush1.msra.mxu0 0.0
    %234 = vmatprep.subr.mxu0 0.0
    %235 = vmatpush1.msra.mxu0 0.0
    %236 = vmatprep.subr.mxu0 0.0
    %237 = vmatpush1.msra.mxu0 0.0
    %238 = vmatprep.subr.mxu0 0.0
    %239 = vmatpush1.msra.mxu0 0.0
    %240 = vmatprep.subr.mxu0 0.0
    %241 = vmatpush1.msra.mxu0 0.0
    %242 = vmatprep.subr.mxu0 0.0
    %243 = vmatpush1.msra.mxu0 0.0
    %244 = vmatprep.subr.mxu0 0.0
    %245 = vmatpush1.msra.mxu0 0.0
    %246 = vmatprep.subr.mxu0 0.0
    %247 = vmatpush1.msra.mxu0 0.0
    %248 = vmatprep.mubr.f32.mxu0 0.0
    %249 = vmatmul.mubr.f32.gmra.mrb[0].mxu0 %v178
    %v250 = vpop.f32.mrb[0].mxu0
    %v251 = vadd.f32 %v174, %v250
    %v252 = vpop.f32.mrb[0].mxu0
    %253 = vdwg.mxu0
    %v254 = vmax.f32 %v251, 0.0
    %v255 = vld [vmem:[#allocation8] sm:$0xff]
    %v256 = vld [vmem:[#allocation8 + $0x8] sm:$0xff]
    %v257 = vld [vmem:[#allocation8 + $0x10] sm:$0xff]
    %v258 = vld [vmem:[#allocation8 + $0x18] sm:$0x3f]
    %v259 = vld [vmem:[%s6] sm:$0x1]
    %v261 = vlaneseq
    %v262 = vshrl.u32 %v261, 7
    %v263 = vsub.s32 0, %v262
    %v264 = vrot.slane %v259, %v263
    %v267 = vsel %vm176, %v254, 0
    %v270 = vsel %vm180, %v258, 0
    %272 = vmatprep.subr.mxu0 0.0
    %273 = vmatpush1.msra.mxu0 %v255
    %274 = vmatprep.subr.mxu0 0.0
    %275 = vmatpush1.msra.mxu0 %v256
    %276 = vmatprep.subr.mxu0 0.0
    %277 = vmatpush1.msra.mxu0 %v257
    %278 = vmatprep.subr.mxu0 0.0
    %279 = vmatpush1.msra.mxu0 %v270
    %280 = vmatprep.subr.mxu0 0.0
    %281 = vmatpush1.msra.mxu0 0.0
    %282 = vmatprep.subr.mxu0 0.0
    %283 = vmatpush1.msra.mxu0 0.0
    %284 = vmatprep.subr.mxu0 0.0
    %285 = vmatpush1.msra.mxu0 0.0
    %286 = vmatprep.subr.mxu0 0.0
    %287 = vmatpush1.msra.mxu0 0.0
    %288 = vmatprep.subr.mxu0 0.0
    %289 = vmatpush1.msra.mxu0 0.0
    %290 = vmatprep.subr.mxu0 0.0
    %291 = vmatpush1.msra.mxu0 0.0
    %292 = vmatprep.subr.mxu0 0.0
    %293 = vmatpush1.msra.mxu0 0.0
    %294 = vmatprep.subr.mxu0 0.0
    %295 = vmatpush1.msra.mxu0 0.0
    %296 = vmatprep.subr.mxu0 0.0
    %297 = vmatpush1.msra.mxu0 0.0
    %298 = vmatprep.subr.mxu0 0.0
    %299 = vmatpush1.msra.mxu0 0.0
    %300 = vmatprep.subr.mxu0 0.0
    %301 = vmatpush1.msra.mxu0 0.0
    %302 = vmatprep.subr.mxu0 0.0
    %303 = vmatpush1.msra.mxu0 0.0
    %304 = vmatprep.subr.mxu0 0.0
    %305 = vmatpush1.msra.mxu0 0.0
    %306 = vmatprep.subr.mxu0 0.0
    %307 = vmatpush1.msra.mxu0 0.0
    %308 = vmatprep.subr.mxu0 0.0
    %309 = vmatpush1.msra.mxu0 0.0
    %310 = vmatprep.subr.mxu0 0.0
    %311 = vmatpush1.msra.mxu0 0.0
    %312 = vmatprep.subr.mxu0 0.0
    %313 = vmatpush1.msra.mxu0 0.0
    %314 = vmatprep.subr.mxu0 0.0
    %315 = vmatpush1.msra.mxu0 0.0
    %316 = vmatprep.subr.mxu0 0.0
    %317 = vmatpush1.msra.mxu0 0.0
    %318 = vmatprep.subr.mxu0 0.0
    %319 = vmatpush1.msra.mxu0 0.0
    %320 = vmatprep.subr.mxu0 0.0
    %321 = vmatpush1.msra.mxu0 0.0
    %322 = vmatprep.subr.mxu0 0.0
    %323 = vmatpush1.msra.mxu0 0.0
    %324 = vmatprep.subr.mxu0 0.0
    %325 = vmatpush1.msra.mxu0 0.0
    %326 = vmatprep.subr.mxu0 0.0
    %327 = vmatpush1.msra.mxu0 0.0
    %328 = vmatprep.subr.mxu0 0.0
    %329 = vmatpush1.msra.mxu0 0.0
    %330 = vmatprep.subr.mxu0 0.0
    %331 = vmatpush1.msra.mxu0 0.0
    %332 = vmatprep.subr.mxu0 0.0
    %333 = vmatpush1.msra.mxu0 0.0
    %334 = vmatprep.subr.mxu0 0.0
    %335 = vmatpush1.msra.mxu0 0.0
    %336 = vmatprep.mubr.f32.mxu0 0.0
    %337 = vmatmul.mubr.f32.gmra.mrb[0].mxu0 %v267
    %v338 = vpop.f32.mrb[0].mxu0
    %v339 = vadd.f32 %v264, %v338
    %v340 = vpop.f32.mrb[0].mxu0
    %341 = vdwg.mxu0
    %v342 = vlaneseq
    %v343 = vand.u32 %v342, 127
    %vm344 = vcmp.lt.s32.totalorder %v343, 8
    %v345 = vsel %vm344, %v339, -1e+30
    %346 = vmax.xlane.f32.xlu0 %v345
    %v347 = vpop.xlane.xlu0 %346
    %v348 = vsub.f32 %v345, %v347
    %v349 = vmul.f32 %v348, 1.442695
    %v350 = vpow.pop %v349
    %351 = vadd.xlane.f32.xlu0 %v350
    %v352 = vpop.xlane.xlu0 %351
    %v353 = vrcp.pop %v352
    %v354 = vmul.f32 %v350, %v353
    %vm355 = vcmp.eq.s32.totalorder %v343, 8
    %v356 = vsel %vm355, %v339, %v354
    %357 = vst [vmem:[#allocation10] sm:$0xff] %v356
    // Predicated region
    $region46: #{tpu_custom_call.1} parent=1 // pred_check
      _
    $region47: #{tpu_custom_call.1} parent=1 // pred_check_branch
      %359 = sbr.rel (0) target = $region49
    $region48: #{tpu_custom_call.1} parent=1 // pred_region
      %s361 = ssub.s32 128, 128
      %362 = vsyncadd [#allocation4], %s361
      %s364 = sshll.u32 [#allocation10], 4
      %s365 = int_to_ptr.vmem [resolvable:$true] %s364
      %367 = dma.vmem_to_hbm [thread:$0]  %s365, 128, %s7, [#allocation4]
    $region49: #{tpu_custom_call.1} parent=1 // pred_fallthru
      _
    // Predicated region
    $region50: #{tpu_custom_call.1} parent=1 // pred_check
      _
    $region51: #{tpu_custom_call.1} parent=1 // pred_check_branch
      %369 = sbr.rel (0) target = $region53
    $region52: #{tpu_custom_call.1} parent=1 // pred_region
      %370 = dma.done [#allocation4], 128
    $region53: #{tpu_custom_call.1} parent=1 // pred_fallthru
      _
    %371 = vsyncpa [#allocation3], 1
    %372 = vsyncpa [#allocation6], 1
    %373 = vsyncpa [#allocation9], 1
    %374 = vsyncpa [#allocation4], 1

</llo_original>
